<compile_context>
chip_gen: v7x
topology: tpu7x:2x2x1
jax: 0.10.0
libtpu: 0.0.40
codegen_flags: <defaults>
</compile_context>

<pallas_src>
import jax
import jax.numpy as jnp
from jax.experimental import pallas as pl
from jax.experimental.pallas import tpu as pltpu

_LN2 = 0.6931471824645996  # float32 log(2)


def _ssp(v):
    # shifted softplus -- the standard PhysNet activation_fn (f32 on VPU/EUP)
    return jax.nn.softplus(v) - _LN2


def _round_up(x, m):
    return (x + m - 1) // m * m


def _pick_vmem_limit():
    """Generation-aware VMEM scoped limit (v7x has only 64 MiB per TensorCore)."""
    cap = 128 * 1024 * 1024
    try:
        info = pltpu.get_tpu_info()
        cap = int(getattr(info, "vmem_capacity_bytes", cap))
    except Exception:
        pass
    if cap <= 64 * 1024 * 1024:          # v7x-class: leave headroom for scratch
        return 36 * 1024 * 1024
    return 64 * 1024 * 1024              # v5e / v6e: 128 MiB physical


def _resident_spec(shape, index_map):
    """BlockSpec for grid-invariant (resident) operands; single-buffered."""
    try:
        return pl.BlockSpec(shape, index_map, pipeline_mode=pl.Buffered(1))
    except (AttributeError, TypeError):
        return pl.BlockSpec(shape, index_map)


# ----------------------------------------------------------------------------
# Kernel 1: per-atom dense path.
#   xa = ssp(x);  [xi | yj] = ssp(xa @ [W_i | W_j] + [b_i | b_j])
# One fused 2*Fp-wide matmul per atom tile; weights resident.
# ----------------------------------------------------------------------------
def _atom_dense_kernel(x_ref, w_ij_ref, b_ij_ref, xi_ref, yj_ref):
    fp = xi_ref.shape[1]
    xa = _ssp(x_ref[...])                            # f32 elementwise
    z = jnp.dot(xa.astype(jnp.bfloat16), w_ij_ref[...],
                preferred_element_type=jnp.float32) + b_ij_ref[...]
    xi_ref[...] = _ssp(z[:, :fp])
    yj_ref[...] = _ssp(z[:, fp:])


# ----------------------------------------------------------------------------
# Kernel 2: pair path.
#   g = k2f(rbf);  pxj = g * yj[idx_j];  xj = segment_sum(pxj, idx_i)
# Grid over pair tiles ("arbitrary"); xj is a resident [N, Fp] accumulator.
# Gather and scatter are one-hot matmuls on the MXU (no per-pair RMW loop,
# no SMEM index prefetch).  For very large N a sorted segment-accumulate
# would be preferable (TODO below); pair_tile is capped so the one-hots fit.
# ----------------------------------------------------------------------------
def _pair_message_kernel(rbf_ref, idxj_ref, idxi_ref, w_k2f_ref, yj_ref, xj_ref):
    @pl.when(pl.program_id(0) == 0)
    def _():
        xj_ref[...] = jnp.zeros_like(xj_ref)

    tp = rbf_ref.shape[0]
    n_pad = yj_ref.shape[0]

    # g = k2f(rbf) for this pair tile (no bias); padded pairs -> zero rows.
    g = jnp.dot(rbf_ref[...].astype(jnp.bfloat16), w_k2f_ref[...],
                preferred_element_type=jnp.float32)               # (tp, Fp)

    # Gather yj[idx_j]: sel_j[p, a] = 1 iff a == idx_j[p]; exact in f32.
    lane_atoms = jax.lax.broadcasted_iota(jnp.int32, (tp, n_pad), 1)
    sel_j = (lane_atoms == idxj_ref[...]).astype(jnp.float32)     # (tp, n_pad)
    gathered = jnp.dot(sel_j, yj_ref[...],
                       preferred_element_type=jnp.float32)        # (tp, Fp)
    pxj = g * gathered

    # Scatter-add (segment_sum over idx_i): sel_i[a, p] = 1 iff a == idx_i[p].
    # Padded pairs have g == 0 so they contribute nothing to atom 0.
    sub_atoms = jax.lax.broadcasted_iota(jnp.int32, (n_pad, tp), 0)
    sel_i = (sub_atoms == idxi_ref[...]).astype(jnp.float32)      # (n_pad, tp)
    xj_ref[...] += jnp.dot(sel_i, pxj, preferred_element_type=jnp.float32)
    # TODO(synk): for very large N / P, switch to pairs sorted by idx_i with
    # per-core disjoint destination ranges (megacore) instead of the one-hot.


# ----------------------------------------------------------------------------
# Kernel 3: message = xi + xj -> residual stack -> ssp -> u*x + dense(message)
# Grid over atom tiles, all weights resident (single-buffered).
# ----------------------------------------------------------------------------
def _update_kernel(x_ref, xi_ref, xj_ref,
                   res_w1_ref, res_b1_ref, res_w2_ref, res_b2_ref,
                   w_d_ref, b_d_ref, u_ref,
                   out_ref):
    message = xi_ref[...] + xj_ref[...]
    num_res = res_w1_ref.shape[0]
    for r in range(num_res):                         # small, static -> unrolled
        y = _ssp(message)
        h = _ssp(jnp.dot(y.astype(jnp.bfloat16), res_w1_ref[r],
                         preferred_element_type=jnp.float32) + res_b1_ref[r])
        message = message + (
            jnp.dot(h.astype(jnp.bfloat16), res_w2_ref[r],
                    preferred_element_type=jnp.float32) + res_b2_ref[r])
    message = _ssp(message)
    out_ref[...] = (u_ref[...] * x_ref[...]
                    + jnp.dot(message.astype(jnp.bfloat16), w_d_ref[...],
                              preferred_element_type=jnp.float32)
                    + b_d_ref[...])


# ----------------------------------------------------------------------------
# Wrapper: pads to TPU-friendly shapes, launches the three pipelined kernels.
# ----------------------------------------------------------------------------
def interaction_layer(x, rbf, idx_i, idx_j, params, *,
                      atom_tile=512, pair_tile=1024, vmem_limit_bytes=None):
    # TODO(synk): dropout (rate > 0, training mode) not implemented; rate = 0.0.
    f32, bf16 = jnp.float32, jnp.bfloat16
    n_atoms, feat = x.shape
    n_pairs, kdim = rbf.shape
    n_res = params["res_w1"].shape[0]
    assert n_res >= 1, "num_residual == 0 not supported by this wrapper"

    vmem_limit = (_pick_vmem_limit() if vmem_limit_bytes is None
                  else int(vmem_limit_bytes))

    fp = _round_up(feat, 128)                        # lane-dense feature dim
    kp = _round_up(kdim, 128)                        # lane-dense rbf dim

    tn = atom_tile if n_atoms >= atom_tile else _round_up(n_atoms, 8)
    n_pad = _round_up(n_atoms, tn)

    # Cap the pair tile so each in-kernel one-hot (n_pad * tp f32) stays small.
    onehot_budget = 8 * 1024 * 1024
    tp_cap = max(8, (onehot_budget // (4 * n_pad)) // 8 * 8)
    eff_pair_tile = min(pair_tile, tp_cap)
    tp = eff_pair_tile if n_pairs >= eff_pair_tile else _round_up(n_pairs, 8)
    p_pad = _round_up(n_pairs, tp)

    def pad2(a, d0, d1):
        return jnp.pad(a, ((0, d0 - a.shape[0]), (0, d1 - a.shape[1])))

    def pad3(a, d0, d1, d2):
        return jnp.pad(a, ((0, d0 - a.shape[0]), (0, d1 - a.shape[1]),
                           (0, d2 - a.shape[2])))

    # Activations / data stay f32, zero-padded (padded weight rows/cols are
    # zero so real output columns are unaffected).
    x_p = pad2(x.astype(f32), n_pad, fp)
    rbf_p = pad2(rbf.astype(f32), p_pad, kp)         # padded pairs -> g == 0
    idx_i_row = jnp.pad(idx_i.astype(jnp.int32), (0, p_pad - n_pairs)).reshape(1, p_pad)
    idx_j_col = jnp.pad(idx_j.astype(jnp.int32), (0, p_pad - n_pairs)).reshape(p_pad, 1)

    # Weights pre-cast to bf16 (half the resident-weight DMA), biases stay f32.
    w_k2f = pad2(params["w_k2f"], kp, fp).astype(bf16)
    w_ij = jnp.concatenate([pad2(params["w_i"], fp, fp),
                            pad2(params["w_j"], fp, fp)], axis=1).astype(bf16)
    b_ij = jnp.concatenate([pad2(params["b_i"], 1, fp),
                            pad2(params["b_j"], 1, fp)], axis=1).astype(f32)
    res_w1 = pad3(params["res_w1"], n_res, fp, fp).astype(bf16)
    res_b1 = pad3(params["res_b1"], n_res, 1, fp).astype(f32)
    res_w2 = pad3(params["res_w2"], n_res, fp, fp).astype(bf16)
    res_b2 = pad3(params["res_b2"], n_res, 1, fp).astype(f32)
    w_d = pad2(params["w_d"], fp, fp).astype(bf16)
    b_d = pad2(params["b_d"], 1, fp).astype(f32)
    u = pad2(params["u"], 1, fp).astype(f32)

    # ---------------- kernel 1: fused xi|yj over atom tiles ------------------
    xi, yj = pl.pallas_call(
        _atom_dense_kernel,
        out_shape=(jax.ShapeDtypeStruct((n_pad, fp), f32),
                   jax.ShapeDtypeStruct((n_pad, fp), f32)),
        grid_spec=pltpu.PrefetchScalarGridSpec(
            num_scalar_prefetch=0,
            grid=(n_pad // tn,),
            in_specs=[
                pl.BlockSpec((tn, fp), lambda i: (i, 0)),           # x tile
                _resident_spec((fp, 2 * fp), lambda i: (0, 0)),     # [w_i|w_j]
                _resident_spec((1, 2 * fp), lambda i: (0, 0)),      # [b_i|b_j]
            ],
            out_specs=[
                pl.BlockSpec((tn, fp), lambda i: (i, 0)),
                pl.BlockSpec((tn, fp), lambda i: (i, 0)),
            ],
        ),
        compiler_params=pltpu.CompilerParams(
            dimension_semantics=("parallel",),
            vmem_limit_bytes=vmem_limit),
        cost_estimate=pl.CostEstimate(
            flops=int(4 * n_pad * fp * fp),
            transcendentals=int(6 * n_pad * fp),
            bytes_accessed=int(4 * 3 * n_pad * fp + 2 * 2 * fp * fp)),
    )(x_p, w_ij, b_ij)

    # ---------------- kernel 2: pair gather * g, segment-sum -----------------
    xj = pl.pallas_call(
        _pair_message_kernel,
        out_shape=jax.ShapeDtypeStruct((n_pad, fp), f32),
        grid_spec=pltpu.PrefetchScalarGridSpec(
            num_scalar_prefetch=0,
            grid=(p_pad // tp,),
            in_specs=[
                pl.BlockSpec((tp, kp), lambda b: (b, 0)),           # rbf tile
                pl.BlockSpec((tp, 1), lambda b: (b, 0)),            # idx_j column
                pl.BlockSpec((1, tp), lambda b: (0, b)),            # idx_i row
                _resident_spec((kp, fp), lambda b: (0, 0)),         # w_k2f resident
                _resident_spec((n_pad, fp), lambda b: (0, 0)),      # yj resident
            ],
            out_specs=pl.BlockSpec((n_pad, fp), lambda b: (0, 0)),  # xj accumulator
        ),
        compiler_params=pltpu.CompilerParams(
            dimension_semantics=("arbitrary",),       # accumulator across tiles
            vmem_limit_bytes=vmem_limit),
        cost_estimate=pl.CostEstimate(
            flops=int(2 * p_pad * kp * fp + 4 * p_pad * n_pad * fp + p_pad * fp),
            transcendentals=0,
            bytes_accessed=int(4 * (p_pad * kp + 2 * n_pad * fp)
                               + 2 * kp * fp + 8 * p_pad)),
    )(rbf_p, idx_j_col, idx_i_row, w_k2f, yj)

    # ---------------- kernel 3: residual stack + output dense ----------------
    out_p = pl.pallas_call(
        _update_kernel,
        out_shape=jax.ShapeDtypeStruct((n_pad, fp), f32),
        grid_spec=pltpu.PrefetchScalarGridSpec(
            num_scalar_prefetch=0,
            grid=(n_pad // tn,),
            in_specs=[
                pl.BlockSpec((tn, fp), lambda i: (i, 0)),            # x tile
                pl.BlockSpec((tn, fp), lambda i: (i, 0)),            # xi tile
                pl.BlockSpec((tn, fp), lambda i: (i, 0)),            # xj tile
                _resident_spec((n_res, fp, fp), lambda i: (0, 0, 0)),  # res_w1
                _resident_spec((n_res, 1, fp), lambda i: (0, 0, 0)),   # res_b1
                _resident_spec((n_res, fp, fp), lambda i: (0, 0, 0)),  # res_w2
                _resident_spec((n_res, 1, fp), lambda i: (0, 0, 0)),   # res_b2
                _resident_spec((fp, fp), lambda i: (0, 0)),          # w_d
                _resident_spec((1, fp), lambda i: (0, 0)),           # b_d
                _resident_spec((1, fp), lambda i: (0, 0)),           # u
            ],
            out_specs=pl.BlockSpec((tn, fp), lambda i: (i, 0)),
        ),
        compiler_params=pltpu.CompilerParams(
            dimension_semantics=("parallel",),
            vmem_limit_bytes=vmem_limit),
        cost_estimate=pl.CostEstimate(
            flops=int(2 * n_pad * fp * fp * (2 * n_res + 1)),
            transcendentals=int(4 * n_pad * fp * (n_res + 1)),
            bytes_accessed=int(4 * 4 * n_pad * fp + 2 * (2 * n_res + 1) * fp * fp)),
    )(x_p, xi, xj, res_w1, res_b1, res_w2, res_b2, w_d, b_d, u)

    return out_p[:n_atoms, :feat]


# ----------------------------------------------------------------------------
# Pure-JAX reference of the same forward pass (module semantics, f32).
# ----------------------------------------------------------------------------
def interaction_layer_ref(x, rbf, idx_i, idx_j, params):
    xa = _ssp(x)
    g = rbf @ params["w_k2f"]
    xi = _ssp(xa @ params["w_i"] + params["b_i"])
    yj = _ssp(xa @ params["w_j"] + params["b_j"])
    pxj = g * yj[idx_j]
    xj = jax.ops.segment_sum(pxj, idx_i, num_segments=x.shape[0])
    message = xi + xj
    for r in range(params["res_w1"].shape[0]):
        y = _ssp(message)
        h = _ssp(y @ params["res_w1"][r] + params["res_b1"][r])
        message = message + (h @ params["res_w2"][r] + params["res_b2"][r])
    message = _ssp(message)
    return params["u"] * x + message @ params["w_d"] + params["b_d"]


def make_params(key, K, F, num_residual):
    ks = jax.random.split(key, 12)
    s = 0.1
    return {
        "w_k2f": s * jax.random.normal(ks[0], (K, F), jnp.float32),   # Dense(K,F,bias=False)
        "w_i": s * jax.random.normal(ks[1], (F, F), jnp.float32),
        "b_i": s * jax.random.normal(ks[2], (1, F), jnp.float32),
        "w_j": s * jax.random.normal(ks[3], (F, F), jnp.float32),
        "b_j": s * jax.random.normal(ks[4], (1, F), jnp.float32),
        "res_w1": s * jax.random.normal(ks[5], (num_residual, F, F), jnp.float32),
        "res_b1": s * jax.random.normal(ks[6], (num_residual, 1, F), jnp.float32),
        "res_w2": s * jax.random.normal(ks[7], (num_residual, F, F), jnp.float32),
        "res_b2": s * jax.random.normal(ks[8], (num_residual, 1, F), jnp.float32),
        "w_d": s * jax.random.normal(ks[9], (F, F), jnp.float32),
        "b_d": s * jax.random.normal(ks[10], (1, F), jnp.float32),
        "u": jnp.ones((1, F), jnp.float32),                           # u = ones([F])
    }


if __name__ == "__main__":
    # Small shapes consistent with the module's forward:
    #   N atoms, F features, K radial basis, P interaction pairs.
    N, F, K, P, NUM_RES = 8, 32, 16, 16, 2

    key = jax.random.PRNGKey(0)
    kx, krbf, ki, kj, kparam = jax.random.split(key, 5)

    x = jax.random.normal(kx, (N, F), jnp.float32)
    rbf = jax.random.uniform(krbf, (P, K), jnp.float32)
    idx_i = jax.random.randint(ki, (P,), 0, N, jnp.int32)
    idx_j = jax.random.randint(kj, (P,), 0, N, jnp.int32)
    params = make_params(kparam, K, F, NUM_RES)

    out = interaction_layer(x, rbf, idx_i, idx_j, params)
    out = jax.block_until_ready(out)

    ref = interaction_layer_ref(x, rbf, idx_i, idx_j, params)
    assert out.shape == (N, F) and out.dtype == jnp.float32
    # Tolerance loosened vs the pure-f32 reference because the dense matmuls
    # feed the MXU with bf16 operands (f32 accumulation); the pair-path
    # gather/segment-sum itself is exact f32.
    assert jnp.allclose(out, ref, rtol=5e-2, atol=5e-2), "mismatch vs reference"

    print("KERNEL_OK")
</pallas_src>

<mosaic_0001>
module attributes {stable_mosaic.version = 11 : i64} {
  func.func @_atom_dense_kernel(%arg0: i32, %arg1: memref<8x128xf32, #tpu.memory_space<vmem>>, %arg2: memref<128x256xbf16, #tpu.memory_space<vmem>>, %arg3: memref<1x256xf32, #tpu.memory_space<vmem>>, %arg4: memref<8x128xf32, #tpu.memory_space<vmem>>, %arg5: memref<8x128xf32, #tpu.memory_space<vmem>>) attributes {dimension_semantics = [#tpu.dimension_semantics<parallel>], iteration_bounds = array<i64: 1>, scalar_prefetch = 0 : i64, scratch_operands = 0 : i64, tpu.core_type = #tpu.core_type<tc>, window_params = [{transform_indices = @transform_0, window_bounds = array<i64: 8, 128>}, {pipeline_mode = #tpu.pipeline_mode<synchronous>, transform_indices = @transform_1, window_bounds = array<i64: 128, 256>}, {pipeline_mode = #tpu.pipeline_mode<synchronous>, transform_indices = @transform_2, window_bounds = array<i64: 1, 256>}, {transform_indices = @transform_3, window_bounds = array<i64: 8, 128>}, {transform_indices = @transform_4, window_bounds = array<i64: 8, 128>}]} {
    %c0 = arith.constant 0 : index
    %c0_0 = arith.constant 0 : index
    %0 = vector.load %arg1[%c0, %c0_0] : memref<8x128xf32, #tpu.memory_space<vmem>>, vector<8x128xf32>
    %cst = arith.constant 0.000000e+00 : f32
    %1 = vector.broadcast %cst : f32 to vector<8x128xf32>
    %2 = arith.maximumf %0, %1 : vector<8x128xf32>
    %3 = vector.broadcast %cst : f32 to vector<8x128xf32>
    %4 = arith.subf %0, %3 : vector<8x128xf32>
    %5 = arith.cmpf one, %4, %4 : vector<8x128xf32>
    %6 = vector.broadcast %cst : f32 to vector<8x128xf32>
    %7 = arith.addf %0, %6 : vector<8x128xf32>
    %8 = math.absf %4 : vector<8x128xf32>
    %cst_1 = arith.constant 0.000000e+00 : f32
    %9 = vector.broadcast %cst_1 : f32 to vector<8x128xf32>
    %10 = arith.subf %9, %8 : vector<8x128xf32>
    %11 = math.exp %10 : vector<8x128xf32>
    %12 = math.log1p %11 : vector<8x128xf32>
    %13 = arith.addf %2, %12 : vector<8x128xf32>
    %14 = arith.select %5, %7, %13 : vector<8x128xi1>, vector<8x128xf32>
    %cst_2 = arith.constant 0.693147182 : f32
    %15 = vector.broadcast %cst_2 : f32 to vector<8x128xf32>
    %16 = arith.subf %14, %15 : vector<8x128xf32>
    %17 = arith.truncf %16 : vector<8x128xf32> to vector<8x128xbf16>
    %c0_3 = arith.constant 0 : index
    %c0_4 = arith.constant 0 : index
    %18 = vector.load %arg2[%c0_3, %c0_4] : memref<128x256xbf16, #tpu.memory_space<vmem>>, vector<128x256xbf16>
    %cst_5 = arith.constant dense<0.000000e+00> : vector<8x256xf32>
    %19 = tpu.matmul %17, %18, %cst_5 {dimension_numbers = #tpu.dot_dimension_numbers<[1], [0], [0], [1], [0, 0, 1, 1], [], []>} : vector<8x128xbf16>, vector<128x256xbf16>, vector<8x256xf32> -> vector<8x256xf32>
    %c0_6 = arith.constant 0 : index
    %c0_7 = arith.constant 0 : index
    %20 = vector.load %arg3[%c0_6, %c0_7] : memref<1x256xf32, #tpu.memory_space<vmem>>, vector<1x256xf32>
    %21 = vector.broadcast %20 : vector<1x256xf32> to vector<8x256xf32>
    %22 = arith.addf %19, %21 : vector<8x256xf32>
    %23 = vector.extract_strided_slice %22 {offsets = [0, 0], sizes = [8, 128], strides = [1, 1]} : vector<8x256xf32> to vector<8x128xf32>
    %cst_8 = arith.constant 0.000000e+00 : f32
    %24 = vector.broadcast %cst_8 : f32 to vector<8x128xf32>
    %25 = arith.maximumf %23, %24 : vector<8x128xf32>
    %26 = vector.broadcast %cst_8 : f32 to vector<8x128xf32>
    %27 = arith.subf %23, %26 : vector<8x128xf32>
    %28 = arith.cmpf one, %27, %27 : vector<8x128xf32>
    %29 = vector.broadcast %cst_8 : f32 to vector<8x128xf32>
    %30 = arith.addf %23, %29 : vector<8x128xf32>
    %31 = math.absf %27 : vector<8x128xf32>
    %cst_9 = arith.constant 0.000000e+00 : f32
    %32 = vector.broadcast %cst_9 : f32 to vector<8x128xf32>
    %33 = arith.subf %32, %31 : vector<8x128xf32>
    %34 = math.exp %33 : vector<8x128xf32>
    %35 = math.log1p %34 : vector<8x128xf32>
    %36 = arith.addf %25, %35 : vector<8x128xf32>
    %37 = arith.select %28, %30, %36 : vector<8x128xi1>, vector<8x128xf32>
    %cst_10 = arith.constant 0.693147182 : f32
    %38 = vector.broadcast %cst_10 : f32 to vector<8x128xf32>
    %39 = arith.subf %37, %38 : vector<8x128xf32>
    %c0_11 = arith.constant 0 : index
    %c0_12 = arith.constant 0 : index
    %40 = vector.load %arg4[%c0_11, %c0_12] : memref<8x128xf32, #tpu.memory_space<vmem>>, vector<8x128xf32>
    tpu.vector_store %arg4[%c0_11, %c0_12], %39 {strides = array<i32>} : memref<8x128xf32, #tpu.memory_space<vmem>>, vector<8x128xf32>,
    %41 = vector.extract_strided_slice %22 {offsets = [0, 128], sizes = [8, 128], strides = [1, 1]} : vector<8x256xf32> to vector<8x128xf32>
    %cst_13 = arith.constant 0.000000e+00 : f32
    %42 = vector.broadcast %cst_13 : f32 to vector<8x128xf32>
    %43 = arith.maximumf %41, %42 : vector<8x128xf32>
    %44 = vector.broadcast %cst_13 : f32 to vector<8x128xf32>
    %45 = arith.subf %41, %44 : vector<8x128xf32>
    %46 = arith.cmpf one, %45, %45 : vector<8x128xf32>
    %47 = vector.broadcast %cst_13 : f32 to vector<8x128xf32>
    %48 = arith.addf %41, %47 : vector<8x128xf32>
    %49 = math.absf %45 : vector<8x128xf32>
    %cst_14 = arith.constant 0.000000e+00 : f32
    %50 = vector.broadcast %cst_14 : f32 to vector<8x128xf32>
    %51 = arith.subf %50, %49 : vector<8x128xf32>
    %52 = math.exp %51 : vector<8x128xf32>
    %53 = math.log1p %52 : vector<8x128xf32>
    %54 = arith.addf %43, %53 : vector<8x128xf32>
    %55 = arith.select %46, %48, %54 : vector<8x128xi1>, vector<8x128xf32>
    %cst_15 = arith.constant 0.693147182 : f32
    %56 = vector.broadcast %cst_15 : f32 to vector<8x128xf32>
    %57 = arith.subf %55, %56 : vector<8x128xf32>
    %c0_16 = arith.constant 0 : index
    %c0_17 = arith.constant 0 : index
    %58 = vector.load %arg5[%c0_16, %c0_17] : memref<8x128xf32, #tpu.memory_space<vmem>>, vector<8x128xf32>
    tpu.vector_store %arg5[%c0_16, %c0_17], %57 {strides = array<i32>} : memref<8x128xf32, #tpu.memory_space<vmem>>, vector<8x128xf32>,
    return
  }
  func.func @transform_0(%arg0: i32) -> (i32, i32) {
    %c0_i32 = arith.constant 0 : i32
    %c0_i32_0 = arith.constant 0 : i32
    return %arg0, %c0_i32 : i32, i32
  }
  func.func @transform_1(%arg0: i32) -> (i32, i32) {
    %c0_i32 = arith.constant 0 : i32
    %c0_i32_0 = arith.constant 0 : i32
    %c0_i32_1 = arith.constant 0 : i32
    return %c0_i32, %c0_i32_0 : i32, i32
  }
  func.func @transform_2(%arg0: i32) -> (i32, i32) {
    %c0_i32 = arith.constant 0 : i32
    %c0_i32_0 = arith.constant 0 : i32
    %c0_i32_1 = arith.constant 0 : i32
    return %c0_i32, %c0_i32_0 : i32, i32
  }
  func.func @transform_3(%arg0: i32) -> (i32, i32) {
    %c0_i32 = arith.constant 0 : i32
    %c0_i32_0 = arith.constant 0 : i32
    return %arg0, %c0_i32 : i32, i32
  }
  func.func @transform_4(%arg0: i32) -> (i32, i32) {
    %c0_i32 = arith.constant 0 : i32
    %c0_i32_0 = arith.constant 0 : i32
    return %arg0, %c0_i32 : i32, i32
  }
}

</mosaic_0001>

<llo_original>
// kernel: tpu_custom_call.1
$region0: #{tpu_custom_call.1}
  #allocation0 [shape = 'u32[]', space=smem, size = 0x4, offset = 0x4, fixed_abs, tag = 'smem constant byte address 0x4 - core index']
  #allocation1 [shape = 'u32[144,128]{1,0:T(1,128)}', space=vmem, size = 0x12000, scoped, tag = 'internal scratch']
  %s0 = inlined_call_operand.hbm [shape: f32[8,128], index: 0, kind: input, shape index: {}]
  %s1 = inlined_call_operand.hbm [shape: bf16[128,256], index: 1, kind: input, shape index: {}]
  %s2 = inlined_call_operand.hbm [shape: f32[1,256], index: 2, kind: input, shape index: {}]
  %s3 = inlined_call_operand.hbm [shape: f32[8,128], index: 3, kind: output, shape index: {0}]
  %s4 = inlined_call_operand.hbm [shape: f32[8,128], index: 4, kind: output, shape index: {1}]
  %5 = xla_tuple %s3, %s4
  %s6 = sld [smem:[#allocation0]]
  $region42: #{tpu_custom_call.1} parent=0
    _
  %s8 = ssub.s32 1, %s6
  %s9 = scalar_select 0, %s8, %s6
  $region1: #{tpu_custom_call.1} parent=0
    #allocation2 [shape = 'u8[4096]{0}', space=vmem, size = 0x1000, scoped, tag = 'input window, operand 0, single buffered']
    #allocation3 [shape = 's32[1]{0}', space=sflag, size = 0x4, scoped, tag = 'scoped memory for tpu_custom_call.1']
    #allocation4 [shape = 's32[1]{0}', space=sflag, size = 0x4, scoped, tag = 'scoped memory for tpu_custom_call.1']
    #allocation5 [shape = 'u8[65536]{0}', space=vmem, size = 0x10000, scoped, tag = 'input window, operand 1, single buffered']
    #allocation6 [shape = 's32[1]{0}', space=sflag, size = 0x4, scoped, tag = 'scoped memory for tpu_custom_call.1']
    #allocation7 [shape = 'u8[1024]{0}', space=vmem, size = 0x400, scoped, tag = 'input window, operand 2, single buffered']
    #allocation8 [shape = 'u8[4096]{0}', space=vmem, size = 0x1000, scoped, tag = 'output window, operand 0, single buffered']
    #allocation9 [shape = 'u8[4096]{0}', space=vmem, size = 0x1000, scoped, tag = 'output window, operand 1, single buffered']
    #allocation10 [shape = 's32[1]{0}', space=sflag, size = 0x4, scoped, tag = 'scoped memory for tpu_custom_call.1']
    %10 = vsyncpa [#allocation3], 0
    %11 = vsyncpa [#allocation6], 0
    %12 = vsyncpa [#allocation4], 0
    %13 = vsyncpa [#allocation10], 0
    // Predicated region
    $region2: #{tpu_custom_call.1} parent=1 // pred_check
      _
    $region3: #{tpu_custom_call.1} parent=1 // pred_check_branch
      %15 = sbr.rel (0) target = $region5
    $region4: #{tpu_custom_call.1} parent=1 // pred_region
      %s17 = ssub.s32 128, 128
      %18 = vsyncadd [#allocation3], %s17
      %s20 = sshll.u32 [#allocation2], 4
      %s21 = int_to_ptr.vmem [resolvable:$true] %s20
      %23 = dma.hbm_to_vmem [thread:$0]  %s0, 128, %s21, [#allocation3]
    $region5: #{tpu_custom_call.1} parent=1 // pred_fallthru
      _
    // Predicated region
    $region6: #{tpu_custom_call.1} parent=1 // pred_check
      _
    $region7: #{tpu_custom_call.1} parent=1 // pred_check_branch
      %25 = sbr.rel (0) target = $region9
    $region8: #{tpu_custom_call.1} parent=1 // pred_region
      %s27 = ssub.s32 2048, 2048
      %28 = vsyncadd [#allocation6], %s27
      %s29 = sshll.u32 [#allocation5], 4
      %s30 = int_to_ptr.vmem [resolvable:$true] %s29
      %35 = dma.hbm_to_vmem [thread:$0]  %s1, 2048, %s30, [#allocation6], 128, 128, 8
    $region9: #{tpu_custom_call.1} parent=1 // pred_fallthru
      _
    // Predicated region
    $region10: #{tpu_custom_call.1} parent=1 // pred_check
      _
    $region11: #{tpu_custom_call.1} parent=1 // pred_check_branch
      %37 = sbr.rel (0) target = $region13
    $region12: #{tpu_custom_call.1} parent=1 // pred_region
      %s39 = ssub.s32 32, 32
      %40 = vsyncadd [#allocation6], %s39
      %s42 = sshll.u32 [#allocation7], 4
      %s43 = int_to_ptr.vmem [resolvable:$true] %s42
      %45 = dma.hbm_to_vmem [thread:$0]  %s2, 32, %s43, [#allocation6]
    $region13: #{tpu_custom_call.1} parent=1 // pred_fallthru
      _
    // Predicated region
    $region14: #{tpu_custom_call.1} parent=1 // pred_check
      _
    $region15: #{tpu_custom_call.1} parent=1 // pred_check_branch
      %47 = sbr.rel (0) target = $region17
    $region16: #{tpu_custom_call.1} parent=1 // pred_region
      %48 = dma.done [#allocation3], 128
    $region17: #{tpu_custom_call.1} parent=1 // pred_fallthru
      _
    // Predicated region
    $region18: #{tpu_custom_call.1} parent=1 // pred_check
      _
    $region19: #{tpu_custom_call.1} parent=1 // pred_check_branch
      %50 = sbr.rel (0) target = $region21
    $region20: #{tpu_custom_call.1} parent=1 // pred_region
      %51 = dma.done [#allocation6], 2048
    $region21: #{tpu_custom_call.1} parent=1 // pred_fallthru
      _
    // Predicated region
    $region22: #{tpu_custom_call.1} parent=1 // pred_check
      _
    $region23: #{tpu_custom_call.1} parent=1 // pred_check_branch
      %53 = sbr.rel (0) target = $region25
    $region24: #{tpu_custom_call.1} parent=1 // pred_region
      %54 = dma.done [#allocation6], 32
    $region25: #{tpu_custom_call.1} parent=1 // pred_fallthru
      _
    %v56 = vld [vmem:[#allocation2] sm:$0xff]
    %v57 = vmax.f32 %v56, 0.0
    %vm58 = vcmp.ne.f32.partialorder %v56, %v56
    %v59 = vadd.f32 %v56, 0.0
    %v60 = vand.u32 2147483647, %v56
    %v61 = vsub.f32 0.0, %v60
    %v62 = vmul.f32 %v61, 1.442695
    %v63 = vpow.pop %v62
    %v64 = vadd.f32 %v63, 1.0
    %v65 = vlog2.pop %v64
    %v66 = vmul.f32 %v65, 0.6931472
    %v67 = vmul.f32 -0.5, %v63
    %v68 = vadd.f32 %v67, 1.0
    %v69 = vmul.f32 %v68, %v63
    %v70 = vand.u32 2147483647, %v63
    %vm71 = vcmp.lt.f32.partialorder %v70, 0.0004427343
    %v72 = vsel %vm71, %v69, %v66
    %v73 = vadd.f32 %v57, %v72
    %v74 = vsel %vm58, %v59, %v73
    %v75 = vsub.f32 %v74, 0.6931472
    %v76 = vpack.c.bf16 %v75, %v75
    %v77 = vld [vmem:[#allocation5] sm:$0xff]
    %v78 = vld [vmem:[#allocation5 + $0x8] sm:$0xff]
    %v79 = vld [vmem:[#allocation5 + $0x10] sm:$0xff]
    %v80 = vld [vmem:[#allocation5 + $0x18] sm:$0xff]
    %v81 = vld [vmem:[#allocation5 + $0x20] sm:$0xff]
    %v82 = vld [vmem:[#allocation5 + $0x28] sm:$0xff]
    %v83 = vld [vmem:[#allocation5 + $0x30] sm:$0xff]
    %v84 = vld [vmem:[#allocation5 + $0x38] sm:$0xff]
    %v85 = vld [vmem:[#allocation5 + $0x40] sm:$0xff]
    %v86 = vld [vmem:[#allocation5 + $0x48] sm:$0xff]
    %v87 = vld [vmem:[#allocation5 + $0x50] sm:$0xff]
    %v88 = vld [vmem:[#allocation5 + $0x58] sm:$0xff]
    %v89 = vld [vmem:[#allocation5 + $0x60] sm:$0xff]
    %v90 = vld [vmem:[#allocation5 + $0x68] sm:$0xff]
    %v91 = vld [vmem:[#allocation5 + $0x70] sm:$0xff]
    %v92 = vld [vmem:[#allocation5 + $0x78] sm:$0xff]
    %v93 = vld [vmem:[#allocation7] sm:$0x3]
    %v95 = vlaneseq
    %v96 = vshrl.u32 %v95, 7
    %v97 = vsub.s32 0, %v96
    %v98 = vrot.slane %v93, %v97
    %v99 = vlaneseq
    %v100 = vshrl.u32 %v99, 7
    %v101 = vsub.s32 1, %v100
    %v102 = vrot.slane %v93, %v101
    %v121 = vunpack.c.l.b16 %v77
    %v122 = vunpack.c.h.b16 %v77
    %v123 = vunpack.c.l.b16 %v78
    %v124 = vunpack.c.h.b16 %v78
    %v125 = vunpack.c.l.b16 %v79
    %v126 = vunpack.c.h.b16 %v79
    %v127 = vunpack.c.l.b16 %v80
    %v128 = vunpack.c.h.b16 %v80
    %v129 = vunpack.c.l.b16 %v81
    %v130 = vunpack.c.h.b16 %v81
    %v131 = vunpack.c.l.b16 %v82
    %v132 = vunpack.c.h.b16 %v82
    %v133 = vunpack.c.l.b16 %v83
    %v134 = vunpack.c.h.b16 %v83
    %v135 = vunpack.c.l.b16 %v84
    %v136 = vunpack.c.h.b16 %v84
    %v137 = vunpack.c.l.b16 %v85
    %v138 = vunpack.c.h.b16 %v85
    %v139 = vunpack.c.l.b16 %v86
    %v140 = vunpack.c.h.b16 %v86
    %v141 = vunpack.c.l.b16 %v87
    %v142 = vunpack.c.h.b16 %v87
    %v143 = vunpack.c.l.b16 %v88
    %v144 = vunpack.c.h.b16 %v88
    %v145 = vunpack.c.l.b16 %v89
    %v146 = vunpack.c.h.b16 %v89
    %v147 = vunpack.c.l.b16 %v90
    %v148 = vunpack.c.h.b16 %v90
    %v149 = vunpack.c.l.b16 %v91
    %v150 = vunpack.c.h.b16 %v91
    %v151 = vunpack.c.l.b16 %v92
    %v152 = vunpack.c.h.b16 %v92
    %v153 = vpack.c.b16 %v123, %v121
    %v154 = vpack.c.b16 %v124, %v122
    %v155 = vpack.c.b16 %v127, %v125
    %v156 = vpack.c.b16 %v128, %v126
    %v157 = vpack.c.b16 %v131, %v129
    %v158 = vpack.c.b16 %v132, %v130
    %v159 = vpack.c.b16 %v135, %v133
    %v160 = vpack.c.b16 %v136, %v134
    %v161 = vpack.c.b16 %v139, %v137
    %v162 = vpack.c.b16 %v140, %v138
    %v163 = vpack.c.b16 %v143, %v141
    %v164 = vpack.c.b16 %v144, %v142
    %v165 = vpack.c.b16 %v147, %v145
    %v166 = vpack.c.b16 %v148, %v146
    %v167 = vpack.c.b16 %v151, %v149
    %v168 = vpack.c.b16 %v152, %v150
    %185 = vmatprep.subr.bf16.mxu0 %v154
    %186 = vmatpush1.bf16.msra.mxu0 %v153
    %187 = vmatprep.subr.bf16.mxu0 %v156
    %188 = vmatpush1.bf16.msra.mxu0 %v155
    %189 = vmatprep.subr.bf16.mxu0 %v158
    %190 = vmatpush1.bf16.msra.mxu0 %v157
    %191 = vmatprep.subr.bf16.mxu0 %v160
    %192 = vmatpush1.bf16.msra.mxu0 %v159
    %193 = vmatprep.subr.bf16.mxu0 %v162
    %194 = vmatpush1.bf16.msra.mxu0 %v161
    %195 = vmatprep.subr.bf16.mxu0 %v164
    %196 = vmatpush1.bf16.msra.mxu0 %v163
    %197 = vmatprep.subr.bf16.mxu0 %v166
    %198 = vmatpush1.bf16.msra.mxu0 %v165
    %199 = vmatprep.subr.bf16.mxu0 %v168
    %200 = vmatpush1.bf16.msra.mxu0 %v167
    %201 = vmatprep.subr.bf16.mxu0 0
    %202 = vmatpush1.bf16.msra.mxu0 0
    %203 = vmatprep.subr.bf16.mxu0 0
    %204 = vmatpush1.bf16.msra.mxu0 0
    %205 = vmatprep.subr.bf16.mxu0 0
    %206 = vmatpush1.bf16.msra.mxu0 0
    %207 = vmatprep.subr.bf16.mxu0 0
    %208 = vmatpush1.bf16.msra.mxu0 0
    %209 = vmatprep.subr.bf16.mxu0 0
    %210 = vmatpush1.bf16.msra.mxu0 0
    %211 = vmatprep.subr.bf16.mxu0 0
    %212 = vmatpush1.bf16.msra.mxu0 0
    %213 = vmatprep.subr.bf16.mxu0 0
    %214 = vmatpush1.bf16.msra.mxu0 0
    %215 = vmatprep.subr.bf16.mxu0 0
    %216 = vmatpush1.bf16.msra.mxu0 0
    %217 = vmatprep.mubr.bf16.mxu0 0
    %218 = vmatmul.mubr.bf16.gmra.mrb[0].mxu0 %v76
    %v219 = vpop.f32.mrb[0].mxu0
    %v220 = vadd.f32 %v98, %v219
    %v221 = vpop.f32.mrb[0].mxu0
    %v222 = vadd.f32 %v102, %v221
    %v223 = vpop.f32.mrb[0].mxu0
    %v224 = vpop.f32.mrb[0].mxu0
    %225 = vdwg.mxu0
    %v226 = vmax.f32 %v220, 0.0
    %vm227 = vcmp.ne.f32.partialorder %v220, %v220
    %v228 = vadd.f32 %v220, 0.0
    %v229 = vand.u32 2147483647, %v220
    %v230 = vsub.f32 0.0, %v229
    %v231 = vmul.f32 %v230, 1.442695
    %v232 = vpow.pop %v231
    %v233 = vadd.f32 %v232, 1.0
    %v234 = vlog2.pop %v233
    %v235 = vmul.f32 %v234, 0.6931472
    %v236 = vmul.f32 -0.5, %v232
    %v237 = vadd.f32 %v236, 1.0
    %v238 = vmul.f32 %v237, %v232
    %v239 = vand.u32 2147483647, %v232
    %vm240 = vcmp.lt.f32.partialorder %v239, 0.0004427343
    %v241 = vsel %vm240, %v238, %v235
    %v242 = vadd.f32 %v226, %v241
    %v243 = vsel %vm227, %v228, %v242
    %v244 = vsub.f32 %v243, 0.6931472
    %245 = vst [vmem:[#allocation8] sm:$0xff] %v244
    %v246 = vmax.f32 %v222, 0.0
    %vm247 = vcmp.ne.f32.partialorder %v222, %v222
    %v248 = vadd.f32 %v222, 0.0
    %v249 = vand.u32 2147483647, %v222
    %v250 = vsub.f32 0.0, %v249
    %v251 = vmul.f32 %v250, 1.442695
    %v252 = vpow.pop %v251
    %v253 = vadd.f32 %v252, 1.0
    %v254 = vlog2.pop %v253
    %v255 = vmul.f32 %v254, 0.6931472
    %v256 = vmul.f32 -0.5, %v252
    %v257 = vadd.f32 %v256, 1.0
    %v258 = vmul.f32 %v257, %v252
    %v259 = vand.u32 2147483647, %v252
    %vm260 = vcmp.lt.f32.partialorder %v259, 0.0004427343
    %v261 = vsel %vm260, %v258, %v255
    %v262 = vadd.f32 %v246, %v261
    %v263 = vsel %vm247, %v248, %v262
    %v264 = vsub.f32 %v263, 0.6931472
    %265 = vst [vmem:[#allocation9] sm:$0xff] %v264
    // Predicated region
    $region26: #{tpu_custom_call.1} parent=1 // pred_check
      _
    $region27: #{tpu_custom_call.1} parent=1 // pred_check_branch
      %267 = sbr.rel (0) target = $region29
    $region28: #{tpu_custom_call.1} parent=1 // pred_region
      %s269 = ssub.s32 128, 128
      %270 = vsyncadd [#allocation4], %s269
      %s272 = sshll.u32 [#allocation8], 4
      %s273 = int_to_ptr.vmem [resolvable:$true] %s272
      %275 = dma.vmem_to_hbm [thread:$0]  %s273, 128, %s3, [#allocation4]
    $region29: #{tpu_custom_call.1} parent=1 // pred_fallthru
      _
    // Predicated region
    $region30: #{tpu_custom_call.1} parent=1 // pred_check
      _
    $region31: #{tpu_custom_call.1} parent=1 // pred_check_branch
      %277 = sbr.rel (0) target = $region33
    $region32: #{tpu_custom_call.1} parent=1 // pred_region
      %s279 = ssub.s32 128, 128
      %280 = vsyncadd [#allocation10], %s279
      %s282 = sshll.u32 [#allocation9], 4
      %s283 = int_to_ptr.vmem [resolvable:$true] %s282
      %285 = dma.vmem_to_hbm [thread:$0]  %s283, 128, %s4, [#allocation10]
    $region33: #{tpu_custom_call.1} parent=1 // pred_fallthru
      _
    // Predicated region
    $region34: #{tpu_custom_call.1} parent=1 // pred_check
      _
    $region35: #{tpu_custom_call.1} parent=1 // pred_check_branch
      %287 = sbr.rel (0) target = $region37
    $region36: #{tpu_custom_call.1} parent=1 // pred_region
      %288 = dma.done [#allocation4], 128
    $region37: #{tpu_custom_call.1} parent=1 // pred_fallthru
      _
    // Predicated region
    $region38: #{tpu_custom_call.1} parent=1 // pred_check
      _
    $region39: #{tpu_custom_call.1} parent=1 // pred_check_branch
      %290 = sbr.rel (0) target = $region41
    $region40: #{tpu_custom_call.1} parent=1 // pred_region
      %291 = dma.done [#allocation10], 128
    $region41: #{tpu_custom_call.1} parent=1 // pred_fallthru
      _
    %292 = vsyncpa [#allocation3], 1
    %293 = vsyncpa [#allocation6], 1
    %294 = vsyncpa [#allocation4], 1
    %295 = vsyncpa [#allocation10], 1

</llo_original>
